<compile_context>
chip_gen: v6e
topology: v6e:2x2x1
jax: 0.10.0
libtpu: 0.0.40
codegen_flags: <defaults>
</compile_context>

<pallas_src>
import functools
import math

import jax
import jax.numpy as jnp
from jax.experimental import pallas as pl
from jax.experimental.pallas import tpu as pltpu


def l2norm_rows_kernel(x_ref, o_ref):
    """Row-wise L2 normalization of the embeddings, done once (hoisted)."""
    x = x_ref[...].astype(jnp.float32)
    inv = jax.lax.rsqrt(jnp.sum(x * x, axis=1, keepdims=True))  # EUP rsqrt
    o_ref[...] = (x * inv).astype(o_ref.dtype)


def arcface_kernel(xn_ref, w_ref, label_ref, o_ref, *, s, cos_m, sin_m, mm_dtype):
    # --- column-wise L2 normalization of this weight tile (D fully resident)
    w = w_ref[...].astype(jnp.float32)                    # (D, TC)
    w = w * jax.lax.rsqrt(jnp.sum(w * w, axis=0, keepdims=True))

    # --- cos_theta tile on the MXU (bf16 operands, f32 accumulation)
    cos_t = jnp.dot(xn_ref[...], w.astype(mm_dtype),
                    preferred_element_type=jnp.float32)    # (TB, TC) f32
    cos_t = jnp.clip(cos_t, -1.0, 1.0)

    # --- hit mask: global column == label[b]  (label == -1 -> no margin)
    label = label_ref[...]                                 # (TB, 1) int32
    tc = cos_t.shape[1]
    col = pl.program_id(1) * tc + jax.lax.broadcasted_iota(jnp.int32, cos_t.shape, 1)
    hit = (label != jnp.int32(-1)) & (col == label)        # (TB, TC) bool

    # --- margin only on the (at most one) hit logit per row
    # masked row-reduce picks the hit cos value (or 0 if no hit in this tile)
    c_hit = jnp.sum(jnp.where(hit, cos_t, 0.0), axis=1, keepdims=True)   # (TB, 1)
    sin_hit = jnp.sqrt(jnp.maximum(1.0 - c_hit * c_hit, 0.0))            # EUP, TB elems
    # cos(acos(c)+m) * s  with s folded into the constants
    phi_s = c_hit * jnp.float32(s * cos_m) - sin_hit * jnp.float32(s * sin_m)

    o_ref[...] = jnp.where(hit, phi_s, cos_t * jnp.float32(s))


def _pick_tile(total, candidates):
    for t in candidates:
        if t <= total and total % t == 0:
            return t
    return total  # full extent (always a legal block size)


def arcface_forward(embeddings, weight, label, s=64.0, m=0.5, *,
                    use_bf16=True, b_tile=None, c_tile=None):
    """Pallas ArcFace forward.  embeddings (B, D) f32, weight (D, C) f32,
    label (B,) int32 with -1 meaning 'no margin'.  Returns (B, C) f32."""
    B, D = embeddings.shape
    Dw, C = weight.shape
    assert Dw == D
    mm_dtype = jnp.bfloat16 if use_bf16 else jnp.float32
    label2d = label.astype(jnp.int32).reshape(B, 1)

    # ---- step 1: hoisted row-normalization (+ cast to matmul dtype), once ----
    x_norm = pl.pallas_call(
        l2norm_rows_kernel,
        out_shape=jax.ShapeDtypeStruct((B, D), mm_dtype),
        in_specs=[pl.BlockSpec(memory_space=pltpu.MemorySpace.VMEM)],
        out_specs=pl.BlockSpec(memory_space=pltpu.MemorySpace.VMEM),
    )(embeddings)

    # ---- step 2: tiled, double-buffered streaming matmul over the classes ----
    TB = b_tile or _pick_tile(B, (256, 128, 64, 32, 16))   # multiples of 16 (bf16 safe)
    TC = c_tile or _pick_tile(C, (512, 256, 128))          # lane-dense output tiles
    grid = (B // TB, C // TC)

    kernel = functools.partial(
        arcface_kernel, s=float(s), cos_m=math.cos(m), sin_m=math.sin(m),
        mm_dtype=mm_dtype)

    return pl.pallas_call(
        kernel,
        out_shape=jax.ShapeDtypeStruct((B, C), jnp.float32),
        grid_spec=pltpu.PrefetchScalarGridSpec(
            num_scalar_prefetch=0,
            grid=grid,
            in_specs=[
                pl.BlockSpec((TB, D), lambda b, c: (b, 0)),   # normalized x
                pl.BlockSpec((D, TC), lambda b, c: (0, c)),   # weight slab
                pl.BlockSpec((TB, 1), lambda b, c: (b, 0)),   # labels
            ],
            out_specs=pl.BlockSpec((TB, TC), lambda b, c: (b, c)),
        ),
        compiler_params=pltpu.CompilerParams(
            # both axes independent -> megacore sharding on v7x
            dimension_semantics=("parallel", "parallel"),
            # explicit scoped limit; tiles above stay well inside this on v5e/v6e/v7x
            vmem_limit_bytes=32 * 1024 * 1024,
        ),
    )(x_norm, weight, label2d)


def arcface_reference(embeddings, weight, label, s=64.0, m=0.5):
    """Pure-JAX reference mirroring the PyTorch code (acos / cos path)."""
    x = embeddings / jnp.linalg.norm(embeddings, axis=1, keepdims=True)
    w = weight / jnp.linalg.norm(weight, axis=0, keepdims=True)
    cos_t = jnp.dot(x, w, precision=jax.lax.Precision.HIGHEST)
    cos_t = jnp.clip(cos_t, -1.0, 1.0)
    theta = jnp.arccos(cos_t)
    col = jnp.arange(cos_t.shape[1])[None, :]
    hit = (label[:, None] != -1) & (col == label[:, None])
    theta = theta + jnp.where(hit, m, 0.0)
    return jnp.cos(theta) * s


if __name__ == "__main__":
    B, D, C = 8, 64, 1024   # batch, in_features, out_features (2 class tiles of 512)
    s, m = 64.0, 0.5

    key = jax.random.PRNGKey(0)
    k_x, k_w = jax.random.split(key)

    embeddings = jax.random.normal(k_x, (B, D), dtype=jnp.float32)
    # nn.init.normal_(self.kernel, std=0.01)
    weight = 0.01 * jax.random.normal(k_w, (D, C), dtype=jnp.float32)
    # labels: valid class ids spanning both class tiles, plus -1 (no margin)
    label = jnp.array([3, -1, 7, 900, 0, -1, 555, 9], dtype=jnp.int32)

    ref = arcface_reference(embeddings, weight, label, s=s, m=m)

    # exact path: f32 matmul, tight tolerance
    out_f32 = jax.block_until_ready(
        arcface_forward(embeddings, weight, label, s=s, m=m, use_bf16=False))
    assert out_f32.shape == (B, C) and out_f32.dtype == jnp.float32
    assert jnp.allclose(out_f32, ref, rtol=1e-3, atol=1e-3), "f32 path mismatch"

    # fast path: bf16 MXU operands, f32 accumulation (v6e/v7x fast path)
    out_bf16 = jax.block_until_ready(
        arcface_forward(embeddings, weight, label, s=s, m=m, use_bf16=True))
    assert out_bf16.shape == (B, C) and out_bf16.dtype == jnp.float32
    assert jnp.allclose(out_bf16, ref, rtol=2e-2, atol=2e-1), "bf16 path mismatch"

    print("KERNEL_OK")
</pallas_src>

<mosaic_0001>
module attributes {stable_mosaic.version = 11 : i64} {
  func.func @l2norm_rows_kernel(%arg0: memref<8x64xf32, #tpu.memory_space<vmem>>, %arg1: memref<8x64xf32, #tpu.memory_space<vmem>>) attributes {dimension_semantics = [], scalar_prefetch = 0 : i64, scratch_operands = 0 : i64, tpu.core_type = #tpu.core_type<tc>} {
    %c0 = arith.constant 0 : index
    %c0_0 = arith.constant 0 : index
    %0 = vector.load %arg0[%c0, %c0_0] : memref<8x64xf32, #tpu.memory_space<vmem>>, vector<8x64xf32>
    %1 = arith.mulf %0, %0 : vector<8x64xf32>
    %cst = arith.constant dense<0.000000e+00> : vector<8xf32>
    %2 = vector.multi_reduction <add>, %1, %cst [1] : vector<8x64xf32> to vector<8xf32>
    %3 = vector.shape_cast %2 : vector<8xf32> to vector<8x1xf32>
    %4 = math.rsqrt %3 : vector<8x1xf32>
    %5 = vector.broadcast %4 : vector<8x1xf32> to vector<8x64xf32>
    %6 = arith.mulf %0, %5 : vector<8x64xf32>
    %c0_1 = arith.constant 0 : index
    %c0_2 = arith.constant 0 : index
    %7 = vector.load %arg1[%c0_1, %c0_2] : memref<8x64xf32, #tpu.memory_space<vmem>>, vector<8x64xf32>
    tpu.vector_store %arg1[%c0_1, %c0_2], %6 {strides = array<i32>} : memref<8x64xf32, #tpu.memory_space<vmem>>, vector<8x64xf32>,
    return
  }
}

</mosaic_0001>

<llo_original>
// kernel: tpu_custom_call.1
$region0: #{tpu_custom_call.1}
  #allocation0 [shape = 'u32[]', space=smem, size = 0x4, offset = 0x4, fixed_abs, tag = 'smem constant byte address 0x4 - core index']
  #allocation1 [shape = 'u32[144,128]{1,0:T(1,128)}', space=vmem, size = 0x12000, scoped, tag = 'internal scratch']
  %s0 = inlined_call_operand.hbm [shape: f32[8,64], index: 0, kind: input, shape index: {}]
  %s1 = inlined_call_operand.hbm [shape: f32[8,64], index: 1, kind: output, shape index: {}]
  %s2 = sld [smem:[#allocation0]]
  $region18: #{tpu_custom_call.1} parent=0
    _
  %s4 = ssub.s32 1, %s2
  %s5 = scalar_select 0, %s4, %s2
  $region1: #{tpu_custom_call.1} parent=0
    #allocation2 [shape = 'u8[4096]{0}', space=vmem, size = 0x1000, scoped, tag = 'input window, operand 0, single buffered']
    #allocation3 [shape = 's32[1]{0}', space=sflag, size = 0x4, scoped, tag = 'scoped memory for tpu_custom_call.1']
    #allocation4 [shape = 's32[1]{0}', space=sflag, size = 0x4, scoped, tag = 'scoped memory for tpu_custom_call.1']
    #allocation5 [shape = 'u8[4096]{0}', space=vmem, size = 0x1000, scoped, tag = 'output window, operand 0, single buffered']
    %6 = vsyncpa [#allocation3], 0
    %7 = vsyncpa [#allocation4], 0
    // Predicated region
    $region2: #{tpu_custom_call.1} parent=1 // pred_check
      _
    $region3: #{tpu_custom_call.1} parent=1 // pred_check_branch
      %9 = sbr.rel (0) target = $region5
    $region4: #{tpu_custom_call.1} parent=1 // pred_region
      %s11 = ssub.s32 128, 128
      %12 = vsyncadd [#allocation3], %s11
      %s14 = sshll.u32 [#allocation2], 4
      %s15 = int_to_ptr.vmem [resolvable:$true] %s14
      %17 = dma.hbm_to_vmem [thread:$0]  %s0, 128, %s15, [#allocation3]
    $region5: #{tpu_custom_call.1} parent=1 // pred_fallthru
      _
    // Predicated region
    $region6: #{tpu_custom_call.1} parent=1 // pred_check
      _
    $region7: #{tpu_custom_call.1} parent=1 // pred_check_branch
      %19 = sbr.rel (0) target = $region9
    $region8: #{tpu_custom_call.1} parent=1 // pred_region
      %20 = dma.done [#allocation3], 128
    $region9: #{tpu_custom_call.1} parent=1 // pred_fallthru
      _
    %v21 = vld [vmem:[#allocation2] sm:$0xff]
    %v22 = vmul.f32 %v21, %v21
    %vm23 = vcmask 523264
    %v24 = vsel %vm23, %v22, 0.0
    %25 = vadd.xlane.f32.xlu0 %v24
    %v26 = vpop.xlane.xlu0 %25
    %v27 = vrsqrt.pop %v26
    %v28 = vmul.f32 %v21, %v27
    %29 = vst.msk [vmem:[#allocation5] sm:$0xff] %vm23, %v28
    // Predicated region
    $region10: #{tpu_custom_call.1} parent=1 // pred_check
      _
    $region11: #{tpu_custom_call.1} parent=1 // pred_check_branch
      %31 = sbr.rel (0) target = $region13
    $region12: #{tpu_custom_call.1} parent=1 // pred_region
      %s33 = ssub.s32 128, 128
      %34 = vsyncadd [#allocation4], %s33
      %s36 = sshll.u32 [#allocation5], 4
      %s37 = int_to_ptr.vmem [resolvable:$true] %s36
      %39 = dma.vmem_to_hbm [thread:$0]  %s37, 128, %s1, [#allocation4]
    $region13: #{tpu_custom_call.1} parent=1 // pred_fallthru
      _
    // Predicated region
    $region14: #{tpu_custom_call.1} parent=1 // pred_check
      _
    $region15: #{tpu_custom_call.1} parent=1 // pred_check_branch
      %41 = sbr.rel (0) target = $region17
    $region16: #{tpu_custom_call.1} parent=1 // pred_region
      %42 = dma.done [#allocation4], 128
    $region17: #{tpu_custom_call.1} parent=1 // pred_fallthru
      _
    %43 = vsyncpa [#allocation3], 1
    %44 = vsyncpa [#allocation4], 1

</llo_original>
